<compile_context>
chip_gen: v7x
topology: tpu7x:2x2x1
jax: 0.10.0
libtpu: 0.0.40
codegen_flags: <defaults>
</compile_context>

<pallas_src>
import jax
import jax.numpy as jnp
from jax.experimental import pallas as pl
from jax.experimental.pallas import tpu as pltpu

SMOOTH = 1.0
P = 2
LANE = 512            # lane-dense last dim, multiple of 128
MAX_BLOCK_ROWS = 256  # rows per grid step, multiple of 8 (~1 MiB f32 per step)


def _round_up(x, m):
    return (x + m - 1) // m * m


def _pow_p(x, p):
    """x**p without jnp.power for positive integer p (VPU multiplies only)."""
    if isinstance(p, int) and p >= 1:
        r = x
        for _ in range(p - 1):
            r = r * x
        return r
    return jnp.power(x, jnp.float32(p))


def _make_dice_kernel(p):
    def kernel(pred_ref, tgt_ref, out_ref, num_acc, den_acc):
        i = pl.program_id(0)

        @pl.when(i == 0)
        def _init():
            num_acc[...] = jnp.zeros_like(num_acc)
            den_acc[...] = jnp.zeros_like(den_acc)

        pr = pred_ref[...].astype(jnp.float32)
        tg = tgt_ref[...].astype(jnp.float32)

        # Per-lane partial sums only (sublane reduce); the cross-lane reduce is
        # deferred to the final grid step.
        num_acc[...] += jnp.sum(pr * tg, axis=0, keepdims=True)
        den_acc[...] += jnp.sum(_pow_p(pr, p) + _pow_p(tg, p),
                                axis=0, keepdims=True)

        @pl.when(i == pl.num_programs(0) - 1)
        def _finalize():
            out_ref[0] = jnp.sum(num_acc[...])
            out_ref[1] = jnp.sum(den_acc[...])

    return kernel


def binary_dice_loss(predict, target, *, smooth=SMOOTH, p=P):
    """Pallas BinaryDiceLoss forward. predict/target: same shape [N, *]."""
    assert predict.shape[0] == target.shape[0], "predict & target batch size don't match"
    assert predict.shape == target.shape, "predict & target shape mismatch"

    total = predict.size
    pred_flat = predict.reshape(-1)
    tgt_flat = target.reshape(-1)

    rows = pl.cdiv(total, LANE)
    block_rows = min(MAX_BLOCK_ROWS, _round_up(rows, 8))
    rows_padded = _round_up(rows, block_rows)
    padded = rows_padded * LANE
    grid = rows_padded // block_rows

    # Zero-pad (exact: zeros add nothing to either sum), keep original dtype
    # (no wrapper-side up-cast -> half the HBM traffic for bf16 inputs).
    pred2d = jnp.pad(pred_flat, (0, padded - total)).reshape(rows_padded, LANE)
    tgt2d = jnp.pad(tgt_flat, (0, padded - total)).reshape(rows_padded, LANE)

    sums = pl.pallas_call(
        _make_dice_kernel(p),
        out_shape=jax.ShapeDtypeStruct((2,), jnp.float32),
        grid_spec=pltpu.PrefetchScalarGridSpec(
            num_scalar_prefetch=0,
            grid=(grid,),
            in_specs=[
                pl.BlockSpec((block_rows, LANE), lambda i: (i, 0)),
                pl.BlockSpec((block_rows, LANE), lambda i: (i, 0)),
            ],
            out_specs=pl.BlockSpec(memory_space=pltpu.SMEM),
            scratch_shapes=[
                pltpu.VMEM((1, LANE), jnp.float32),  # per-lane sum(pred*target)
                pltpu.VMEM((1, LANE), jnp.float32),  # per-lane sum(pred^p + target^p)
            ],
        ),
        compiler_params=pltpu.CompilerParams(
            dimension_semantics=("arbitrary",)),
    )(pred2d, tgt2d)

    num = 2.0 * sums[0] + jnp.float32(smooth)
    den = sums[1] + jnp.float32(smooth)
    return (1.0 - num / den).astype(jnp.float32)


def _binary_dice_loss_ref(predict, target, *, smooth=SMOOTH, p=P):
    """Pure-JAX reference mirroring the PyTorch module."""
    pr = predict.reshape(predict.shape[0], -1).astype(jnp.float32)
    tg = target.reshape(target.shape[0], -1).astype(jnp.float32)
    num = jnp.sum(pr * tg) * 2.0 + smooth
    den = jnp.sum(pr ** p + tg ** p) + smooth
    return 1.0 - num / den


if __name__ == "__main__":
    key = jax.random.PRNGKey(0)
    k1, k2 = jax.random.split(key)

    # [N, *] = [2, 1, 16, 16]: predicted probabilities + binary mask.
    N, C, H, W = 2, 1, 16, 16
    predict = jax.random.uniform(k1, (N, C, H, W), dtype=jnp.float32,
                                 minval=0.01, maxval=0.99)
    target = (jax.random.uniform(k2, (N, C, H, W), dtype=jnp.float32) > 0.5
              ).astype(jnp.float32)

    loss = binary_dice_loss(predict, target)
    jax.block_until_ready(loss)

    loss_ref = _binary_dice_loss_ref(predict, target)
    assert jnp.allclose(loss, loss_ref, rtol=1e-5, atol=1e-6), (loss, loss_ref)

    print("KERNEL_OK")
</pallas_src>

<mosaic_0001>
module attributes {stable_mosaic.version = 11 : i64} {
  func.func @kernel(%arg0: i32, %arg1: memref<8x512xf32, #tpu.memory_space<vmem>>, %arg2: memref<8x512xf32, #tpu.memory_space<vmem>>, %arg3: memref<2xf32, #tpu.memory_space<smem>>, %arg4: memref<1x512xf32, #tpu.memory_space<vmem>>, %arg5: memref<1x512xf32, #tpu.memory_space<vmem>>) attributes {dimension_semantics = [#tpu.dimension_semantics<arbitrary>], iteration_bounds = array<i64: 1>, scalar_prefetch = 0 : i64, scratch_operands = 2 : i64, tpu.core_type = #tpu.core_type<tc>, window_params = [{transform_indices = @transform_0, window_bounds = array<i64: 8, 512>}, {transform_indices = @transform_1, window_bounds = array<i64: 8, 512>}, {transform_indices = @transform_2, window_bounds = array<i64: 2>}]} {
    %c0_i32 = arith.constant 0 : i32
    %0 = arith.cmpi eq, %arg0, %c0_i32 : i32
    %1 = arith.extui %0 : i1 to i32
    %c0_i32_0 = arith.constant 0 : i32
    %2 = arith.cmpi ne, %1, %c0_i32_0 : i32
    scf.if %2 {
      %cst_15 = arith.constant 0.000000e+00 : f32
      %22 = vector.broadcast %cst_15 : f32 to vector<1x512xf32>
      %c0_16 = arith.constant 0 : index
      %c0_17 = arith.constant 0 : index
      %23 = vector.load %arg4[%c0_16, %c0_17] : memref<1x512xf32, #tpu.memory_space<vmem>>, vector<1x512xf32>
      tpu.vector_store %arg4[%c0_16, %c0_17], %22 {strides = array<i32>} : memref<1x512xf32, #tpu.memory_space<vmem>>, vector<1x512xf32>,
      %cst_18 = arith.constant 0.000000e+00 : f32
      %24 = vector.broadcast %cst_18 : f32 to vector<1x512xf32>
      %c0_19 = arith.constant 0 : index
      %c0_20 = arith.constant 0 : index
      %25 = vector.load %arg5[%c0_19, %c0_20] : memref<1x512xf32, #tpu.memory_space<vmem>>, vector<1x512xf32>
      tpu.vector_store %arg5[%c0_19, %c0_20], %24 {strides = array<i32>} : memref<1x512xf32, #tpu.memory_space<vmem>>, vector<1x512xf32>,
    } else {
    }
    %c0 = arith.constant 0 : index
    %c0_1 = arith.constant 0 : index
    %3 = vector.load %arg1[%c0, %c0_1] : memref<8x512xf32, #tpu.memory_space<vmem>>, vector<8x512xf32>
    %c0_2 = arith.constant 0 : index
    %c0_3 = arith.constant 0 : index
    %4 = vector.load %arg2[%c0_2, %c0_3] : memref<8x512xf32, #tpu.memory_space<vmem>>, vector<8x512xf32>
    %c0_4 = arith.constant 0 : index
    %c0_5 = arith.constant 0 : index
    %5 = vector.load %arg4[%c0_4, %c0_5] : memref<1x512xf32, #tpu.memory_space<vmem>>, vector<1x512xf32>
    %6 = arith.mulf %3, %4 : vector<8x512xf32>
    %cst = arith.constant dense<0.000000e+00> : vector<512xf32>
    %7 = vector.multi_reduction <add>, %6, %cst [0] : vector<8x512xf32> to vector<512xf32>
    %8 = vector.shape_cast %7 : vector<512xf32> to vector<1x512xf32>
    %9 = arith.addf %5, %8 : vector<1x512xf32>
    %c0_6 = arith.constant 0 : index
    %c0_7 = arith.constant 0 : index
    %10 = vector.load %arg4[%c0_6, %c0_7] : memref<1x512xf32, #tpu.memory_space<vmem>>, vector<1x512xf32>
    tpu.vector_store %arg4[%c0_6, %c0_7], %9 {strides = array<i32>} : memref<1x512xf32, #tpu.memory_space<vmem>>, vector<1x512xf32>,
    %c0_8 = arith.constant 0 : index
    %c0_9 = arith.constant 0 : index
    %11 = vector.load %arg5[%c0_8, %c0_9] : memref<1x512xf32, #tpu.memory_space<vmem>>, vector<1x512xf32>
    %12 = arith.mulf %3, %3 : vector<8x512xf32>
    %13 = arith.mulf %4, %4 : vector<8x512xf32>
    %14 = arith.addf %12, %13 : vector<8x512xf32>
    %cst_10 = arith.constant dense<0.000000e+00> : vector<512xf32>
    %15 = vector.multi_reduction <add>, %14, %cst_10 [0] : vector<8x512xf32> to vector<512xf32>
    %16 = vector.shape_cast %15 : vector<512xf32> to vector<1x512xf32>
    %17 = arith.addf %11, %16 : vector<1x512xf32>
    %c0_11 = arith.constant 0 : index
    %c0_12 = arith.constant 0 : index
    %18 = vector.load %arg5[%c0_11, %c0_12] : memref<1x512xf32, #tpu.memory_space<vmem>>, vector<1x512xf32>
    tpu.vector_store %arg5[%c0_11, %c0_12], %17 {strides = array<i32>} : memref<1x512xf32, #tpu.memory_space<vmem>>, vector<1x512xf32>,
    %c0_i32_13 = arith.constant 0 : i32
    %19 = arith.cmpi eq, %arg0, %c0_i32_13 : i32
    %20 = arith.extui %19 : i1 to i32
    %c0_i32_14 = arith.constant 0 : i32
    %21 = arith.cmpi ne, %20, %c0_i32_14 : i32
    scf.if %21 {
      %c0_15 = arith.constant 0 : index
      %c0_16 = arith.constant 0 : index
      %22 = vector.load %arg4[%c0_15, %c0_16] : memref<1x512xf32, #tpu.memory_space<vmem>>, vector<1x512xf32>
      %23 = vector.shape_cast %22 : vector<1x512xf32> to vector<1x1x512xf32>
      %cst_17 = arith.constant dense<0.000000e+00> : vector<1xf32>
      %24 = vector.multi_reduction <add>, %23, %cst_17 [1, 2] : vector<1x1x512xf32> to vector<1xf32>
      %25 = vector.shape_cast %24 : vector<1xf32> to vector<1x1x1xf32>
      %26 = vector.extract %25[0, 0, 0] : f32 from vector<1x1x1xf32>
      %c0_18 = arith.constant 0 : index
      %27 = memref.load %arg3[%c0_18] : memref<2xf32, #tpu.memory_space<smem>>
      memref.store %26, %arg3[%c0_18] : memref<2xf32, #tpu.memory_space<smem>>
      %c0_19 = arith.constant 0 : index
      %c0_20 = arith.constant 0 : index
      %28 = vector.load %arg5[%c0_19, %c0_20] : memref<1x512xf32, #tpu.memory_space<vmem>>, vector<1x512xf32>
      %29 = vector.shape_cast %28 : vector<1x512xf32> to vector<1x1x512xf32>
      %cst_21 = arith.constant dense<0.000000e+00> : vector<1xf32>
      %30 = vector.multi_reduction <add>, %29, %cst_21 [1, 2] : vector<1x1x512xf32> to vector<1xf32>
      %31 = vector.shape_cast %30 : vector<1xf32> to vector<1x1x1xf32>
      %32 = vector.extract %31[0, 0, 0] : f32 from vector<1x1x1xf32>
      %c1 = arith.constant 1 : index
      %33 = memref.load %arg3[%c1] : memref<2xf32, #tpu.memory_space<smem>>
      memref.store %32, %arg3[%c1] : memref<2xf32, #tpu.memory_space<smem>>
    } else {
    }
    return
  }
  func.func @transform_0(%arg0: i32) -> (i32, i32) {
    %c0_i32 = arith.constant 0 : i32
    %c0_i32_0 = arith.constant 0 : i32
    return %arg0, %c0_i32 : i32, i32
  }
  func.func @transform_1(%arg0: i32) -> (i32, i32) {
    %c0_i32 = arith.constant 0 : i32
    %c0_i32_0 = arith.constant 0 : i32
    return %arg0, %c0_i32 : i32, i32
  }
  func.func @transform_2(%arg0: i32) -> i32 {
    %c0_i32 = arith.constant 0 : i32
    %c0_i32_0 = arith.constant 0 : i32
    return %c0_i32 : i32
  }
}

</mosaic_0001>

<llo_original>
// kernel: tpu_custom_call.1
$region0: #{tpu_custom_call.1}
  #allocation0 [shape = 'u32[]', space=smem, size = 0x4, offset = 0x4, fixed_abs, tag = 'smem constant byte address 0x4 - core index']
  #allocation1 [shape = 'u32[144,128]{1,0:T(1,128)}', space=vmem, size = 0x12000, scoped, tag = 'internal scratch']
  #allocation2 [shape = 'f32[1,512]{1,0:T(1,128)}', space=vmem, size = 0x800, scoped, tag = 'scratch operand']
  #allocation3 [shape = 'f32[1,512]{1,0:T(1,128)}', space=vmem, size = 0x800, scoped, tag = 'scratch operand']
  %s0 = inlined_call_operand.hbm [shape: f32[8,512], index: 0, kind: input, shape index: {}]
  %s1 = inlined_call_operand.hbm [shape: f32[8,512], index: 1, kind: input, shape index: {}]
  %s2 = inlined_call_operand.hbm [shape: f32[2], index: 2, kind: output, shape index: {}]
  %s3 = sld [smem:[#allocation0]]
  $region34: #{tpu_custom_call.1} parent=0
    _
  %s5 = ssub.s32 1, %s3
  %s6 = scalar_select 0, %s5, %s3
  $region1: #{tpu_custom_call.1} parent=0
    #allocation4 [shape = 'u8[16384]{0}', space=vmem, size = 0x4000, scoped, tag = 'input window, operand 0, single buffered']
    #allocation5 [shape = 's32[1]{0}', space=sflag, size = 0x4, scoped, tag = 'scoped memory for tpu_custom_call.1']
    #allocation6 [shape = 's32[1]{0}', space=sflag, size = 0x4, scoped, tag = 'scoped memory for tpu_custom_call.1']
    #allocation7 [shape = 'u8[16384]{0}', space=vmem, size = 0x4000, scoped, tag = 'input window, operand 1, single buffered']
    #allocation8 [shape = 's32[1]{0}', space=sflag, size = 0x4, scoped, tag = 'scoped memory for tpu_custom_call.1']
    #allocation9 [shape = 'u8[512]{0}', space=smem, size = 0x200, scoped, tag = 'output window, operand 0, single buffered']
    %7 = vsyncpa [#allocation5], 0
    %8 = vsyncpa [#allocation8], 0
    %9 = vsyncpa [#allocation6], 0
    // Predicated region
    $region2: #{tpu_custom_call.1} parent=1 // pred_check
      _
    $region3: #{tpu_custom_call.1} parent=1 // pred_check_branch
      %11 = sbr.rel (0) target = $region5
    $region4: #{tpu_custom_call.1} parent=1 // pred_region
      %s13 = ssub.s32 512, 512
      %14 = vsyncadd [#allocation5], %s13
      %s16 = sshll.u32 [#allocation4], 4
      %s17 = int_to_ptr.vmem [resolvable:$true] %s16
      %19 = dma.hbm_to_vmem [thread:$0]  %s0, 512, %s17, [#allocation5]
    $region5: #{tpu_custom_call.1} parent=1 // pred_fallthru
      _
    // Predicated region
    $region6: #{tpu_custom_call.1} parent=1 // pred_check
      _
    $region7: #{tpu_custom_call.1} parent=1 // pred_check_branch
      %21 = sbr.rel (0) target = $region9
    $region8: #{tpu_custom_call.1} parent=1 // pred_region
      %s23 = ssub.s32 512, 512
      %24 = vsyncadd [#allocation8], %s23
      %s26 = sshll.u32 [#allocation7], 4
      %s27 = int_to_ptr.vmem [resolvable:$true] %s26
      %29 = dma.hbm_to_vmem [thread:$0]  %s1, 512, %s27, [#allocation8]
    $region9: #{tpu_custom_call.1} parent=1 // pred_fallthru
      _
    // Predicated region
    $region10: #{tpu_custom_call.1} parent=1 // pred_check
      _
    $region11: #{tpu_custom_call.1} parent=1 // pred_check_branch
      %31 = sbr.rel (0) target = $region13
    $region12: #{tpu_custom_call.1} parent=1 // pred_region
      %32 = dma.done [#allocation5], 512
    $region13: #{tpu_custom_call.1} parent=1 // pred_fallthru
      _
    // Predicated region
    $region14: #{tpu_custom_call.1} parent=1 // pred_check
      _
    $region15: #{tpu_custom_call.1} parent=1 // pred_check_branch
      %34 = sbr.rel (0) target = $region17
    $region16: #{tpu_custom_call.1} parent=1 // pred_region
      %35 = dma.done [#allocation8], 512
    $region17: #{tpu_custom_call.1} parent=1 // pred_fallthru
      _
    %p36 = scmp.eq.s32.totalorder 0, 0
    // Predicated region
    $region18: #{tpu_custom_call.1} parent=1 // pred_check
      %p37 = pneg %p36
    $region19: #{tpu_custom_call.1} parent=1 // pred_check_branch
      %39 = sbr.rel (%p37) target = $region21
    $region20: #{tpu_custom_call.1} parent=1 // pred_region
      %v40 = vlaneseq
      %vm41 = vcmp.ge.s32.totalorder %v40, 0
      %vm42 = vcmp.lt.s32.totalorder %v40, 512
      %vm43 = vmand %vm41, %vm42
      %44 = vst.msk [vmem:[#allocation2] sm:$0xf] %vm43, 0.0
      %45 = vst.msk [vmem:[#allocation3] sm:$0xf] %vm43, 0.0
    $region21: #{tpu_custom_call.1} parent=1 // pred_fallthru
      _
    %v46 = vld [vmem:[#allocation4] sm:$0xff]
    %v47 = vld [vmem:[#allocation4 + $0x8] sm:$0xff]
    %v48 = vld [vmem:[#allocation4 + $0x10] sm:$0xff]
    %v49 = vld [vmem:[#allocation4 + $0x18] sm:$0xff]
    %v50 = vld [vmem:[#allocation7] sm:$0xff]
    %v51 = vld [vmem:[#allocation7 + $0x8] sm:$0xff]
    %v52 = vld [vmem:[#allocation7 + $0x10] sm:$0xff]
    %v53 = vld [vmem:[#allocation7 + $0x18] sm:$0xff]
    %v54 = vld [vmem:[#allocation2] sm:$0xf]
    %v55 = vmul.f32 %v46, %v50
    %v56 = vmul.f32 %v47, %v51
    %v57 = vmul.f32 %v48, %v52
    %v58 = vmul.f32 %v49, %v53
    %v59 = vrot.slane %v55, 4
    %v60 = vadd.f32 %v55, %v59
    %v61 = vrot.slane %v60, 2
    %v62 = vadd.f32 %v60, %v61
    %v63 = vrot.slane %v62, 1
    %v64 = vadd.f32 %v62, %v63
    %v65 = vrot.slane %v56, 4
    %v66 = vadd.f32 %v56, %v65
    %v67 = vrot.slane %v66, 2
    %v68 = vadd.f32 %v66, %v67
    %v69 = vrot.slane %v68, 1
    %v70 = vadd.f32 %v68, %v69
    %v71 = vrot.slane %v57, 4
    %v72 = vadd.f32 %v57, %v71
    %v73 = vrot.slane %v72, 2
    %v74 = vadd.f32 %v72, %v73
    %v75 = vrot.slane %v74, 1
    %v76 = vadd.f32 %v74, %v75
    %v77 = vrot.slane %v58, 4
    %v78 = vadd.f32 %v58, %v77
    %v79 = vrot.slane %v78, 2
    %v80 = vadd.f32 %v78, %v79
    %v81 = vrot.slane %v80, 1
    %v82 = vadd.f32 %v80, %v81
    %v87 = vcombine.low %v64, %v70
    %v88 = vcombine.low %v76, %v82
    %v90 = vunpack.c.l.s4 1966171168
    %v91 = vunpack.c.0.s8 %v90
    %v92 = vlaneseq
    %v93 = vshrl.u32 %v92, 7
    %v94 = vsub.s32 %v91, %v93
    %v95 = vrot.slane %v87, %v94
    %v97 = vunpack.c.l.s4 1966171168
    %v98 = vunpack.c.0.s8 %v97
    %v99 = vlaneseq
    %v100 = vshrl.u32 %v99, 7
    %v101 = vsub.s32 %v98, %v100
    %v102 = vrot.slane %v88, %v101
    %v103 = vcombine.low %v95, %v102
    %v105 = vunpack.c.l.s4 1966171168
    %v106 = vunpack.c.0.s8 %v105
    %v107 = vlaneseq
    %v108 = vshrl.u32 %v107, 7
    %v109 = vsub.s32 %v106, %v108
    %v110 = vrot.slane %v103, %v109
    %v112 = vadd.f32 %v54, %v110
    %v113 = vlaneseq
    %vm114 = vcmp.ge.s32.totalorder %v113, 0
    %vm115 = vcmp.lt.s32.totalorder %v113, 512
    %vm116 = vmand %vm114, %vm115
    %117 = vst.msk [vmem:[#allocation2] sm:$0xf] %vm116, %v112
    %v118 = vld [vmem:[#allocation3] sm:$0xf]
    %v119 = vmul.f32 %v46, %v46
    %v120 = vmul.f32 %v47, %v47
    %v121 = vmul.f32 %v48, %v48
    %v122 = vmul.f32 %v49, %v49
    %v123 = vmul.f32 %v50, %v50
    %v124 = vmul.f32 %v51, %v51
    %v125 = vmul.f32 %v52, %v52
    %v126 = vmul.f32 %v53, %v53
    %v127 = vadd.f32 %v119, %v123
    %v128 = vadd.f32 %v120, %v124
    %v129 = vadd.f32 %v121, %v125
    %v130 = vadd.f32 %v122, %v126
    %v131 = vrot.slane %v127, 4
    %v132 = vadd.f32 %v127, %v131
    %v133 = vrot.slane %v132, 2
    %v134 = vadd.f32 %v132, %v133
    %v135 = vrot.slane %v134, 1
    %v136 = vadd.f32 %v134, %v135
    %v137 = vrot.slane %v128, 4
    %v138 = vadd.f32 %v128, %v137
    %v139 = vrot.slane %v138, 2
    %v140 = vadd.f32 %v138, %v139
    %v141 = vrot.slane %v140, 1
    %v142 = vadd.f32 %v140, %v141
    %v143 = vrot.slane %v129, 4
    %v144 = vadd.f32 %v129, %v143
    %v145 = vrot.slane %v144, 2
    %v146 = vadd.f32 %v144, %v145
    %v147 = vrot.slane %v146, 1
    %v148 = vadd.f32 %v146, %v147
    %v149 = vrot.slane %v130, 4
    %v150 = vadd.f32 %v130, %v149
    %v151 = vrot.slane %v150, 2
    %v152 = vadd.f32 %v150, %v151
    %v153 = vrot.slane %v152, 1
    %v154 = vadd.f32 %v152, %v153
    %v159 = vcombine.low %v136, %v142
    %v160 = vcombine.low %v148, %v154
    %v162 = vunpack.c.l.s4 1966171168
    %v163 = vunpack.c.0.s8 %v162
    %v164 = vlaneseq
    %v165 = vshrl.u32 %v164, 7
    %v166 = vsub.s32 %v163, %v165
    %v167 = vrot.slane %v159, %v166
    %v169 = vunpack.c.l.s4 1966171168
    %v170 = vunpack.c.0.s8 %v169
    %v171 = vlaneseq
    %v172 = vshrl.u32 %v171, 7
    %v173 = vsub.s32 %v170, %v172
    %v174 = vrot.slane %v160, %v173
    %v175 = vcombine.low %v167, %v174
    %v177 = vunpack.c.l.s4 1966171168
    %v178 = vunpack.c.0.s8 %v177
    %v179 = vlaneseq
    %v180 = vshrl.u32 %v179, 7
    %v181 = vsub.s32 %v178, %v180
    %v182 = vrot.slane %v175, %v181
    %v184 = vadd.f32 %v118, %v182
    %185 = vst.msk [vmem:[#allocation3] sm:$0xf] %vm116, %v184
    // Predicated region
    $region22: #{tpu_custom_call.1} parent=1 // pred_check
      %p186 = pneg %p36
    $region23: #{tpu_custom_call.1} parent=1 // pred_check_branch
      %188 = sbr.rel (%p186) target = $region25
    $region24: #{tpu_custom_call.1} parent=1 // pred_region
      %v189 = vld [vmem:[#allocation2] sm:$0xf]
      %v191 = vlaneseq
      %v192 = vshrl.u32 %v191, 7
      %v193 = vsub.s32 0, %v192
      %v194 = vrot.slane %v189, %v193
      %v195 = vlaneseq
      %v196 = vshrl.u32 %v195, 7
      %v197 = vsub.s32 1, %v196
      %v198 = vrot.slane %v189, %v197
      %v199 = vlaneseq
      %v200 = vshrl.u32 %v199, 7
      %v201 = vsub.s32 2, %v200
      %v202 = vrot.slane %v189, %v201
      %v203 = vlaneseq
      %v204 = vshrl.u32 %v203, 7
      %v205 = vsub.s32 3, %v204
      %v206 = vrot.slane %v189, %v205
      %vm211 = vcmask 1040384
      %v212 = vsel %vm211, %v194, 0.0
      %v213 = vsel %vm211, %v198, 0.0
      %v214 = vadd.f32 %v212, %v213
      %v215 = vsel %vm211, %v202, 0.0
      %v216 = vadd.f32 %v214, %v215
      %v217 = vsel %vm211, %v206, 0.0
      %v218 = vadd.f32 %v216, %v217
      %219 = vadd.xlane.f32.xlu0 %v218
      %v220 = vpop.xlane.xlu0 %219
      %v221 = vrot.slane %v220, 4
      %v222 = vadd.f32 %v220, %v221
      %v223 = vrot.slane %v222, 2
      %v224 = vadd.f32 %v222, %v223
      %v225 = vrot.slane %v224, 1
      %v226 = vadd.f32 %v224, %v225
      %s227 = vtos %v226
      %s228 = scalar_lea.smem [#allocation9], 0
      %229 = sst [smem:[%s228]] %s227
      %v230 = vld [vmem:[#allocation3] sm:$0xf]
      %v232 = vlaneseq
      %v233 = vshrl.u32 %v232, 7
      %v234 = vsub.s32 0, %v233
      %v235 = vrot.slane %v230, %v234
      %v236 = vlaneseq
      %v237 = vshrl.u32 %v236, 7
      %v238 = vsub.s32 1, %v237
      %v239 = vrot.slane %v230, %v238
      %v240 = vlaneseq
      %v241 = vshrl.u32 %v240, 7
      %v242 = vsub.s32 2, %v241
      %v243 = vrot.slane %v230, %v242
      %v244 = vlaneseq
      %v245 = vshrl.u32 %v244, 7
      %v246 = vsub.s32 3, %v245
      %v247 = vrot.slane %v230, %v246
      %v252 = vsel %vm211, %v235, 0.0
      %v253 = vsel %vm211, %v239, 0.0
      %v254 = vadd.f32 %v252, %v253
      %v255 = vsel %vm211, %v243, 0.0
      %v256 = vadd.f32 %v254, %v255
      %v257 = vsel %vm211, %v247, 0.0
      %v258 = vadd.f32 %v256, %v257
      %259 = vadd.xlane.f32.xlu0 %v258
      %v260 = vpop.xlane.xlu0 %259
      %v261 = vrot.slane %v260, 4
      %v262 = vadd.f32 %v260, %v261
      %v263 = vrot.slane %v262, 2
      %v264 = vadd.f32 %v262, %v263
      %v265 = vrot.slane %v264, 1
      %v266 = vadd.f32 %v264, %v265
      %s267 = vtos %v266
      %s268 = scalar_lea.smem [#allocation9], 1
      %269 = sst [smem:[%s268]] %s267
    $region25: #{tpu_custom_call.1} parent=1 // pred_fallthru
      _
    // Predicated region
    $region26: #{tpu_custom_call.1} parent=1 // pred_check
      _
    $region27: #{tpu_custom_call.1} parent=1 // pred_check_branch
      %271 = sbr.rel (0) target = $region29
    $region28: #{tpu_custom_call.1} parent=1 // pred_region
      %s273 = ssub.s32 16, 16
      %274 = vsyncadd [#allocation6], %s273
      %277 = dma.smem_to_hbm [#allocation9], 16, %s2, [#allocation6]
    $region29: #{tpu_custom_call.1} parent=1 // pred_fallthru
      _
    // Predicated region
    $region30: #{tpu_custom_call.1} parent=1 // pred_check
      _
    $region31: #{tpu_custom_call.1} parent=1 // pred_check_branch
      %279 = sbr.rel (0) target = $region33
    $region32: #{tpu_custom_call.1} parent=1 // pred_region
      %280 = dma.done [#allocation6], 16
    $region33: #{tpu_custom_call.1} parent=1 // pred_fallthru
      _
    %281 = sfence
    %282 = vsyncpa [#allocation5], 1
    %283 = vsyncpa [#allocation8], 1
    %284 = vsyncpa [#allocation6], 1

</llo_original>
